<compile_context>
chip_gen: v7x
topology: tpu7x:2x2x1
jax: 0.10.0
libtpu: 0.0.40
codegen_flags: <defaults>
</compile_context>

<pallas_src>
import functools

import numpy as np

import jax
import jax.numpy as jnp
from jax.experimental import pallas as pl
from jax.experimental.pallas import tpu as pltpu

EPS = 1e-5


# ---------------------------------------------------------------------------
# Fused kernel: one grid step == `nb` images (channels-first, flattened
# spatial on lanes, everything stays in VMEM between the two convs).
# ---------------------------------------------------------------------------
def _dense_layer_kernel(x_ref, s1_ref, b1_ref, w1_ref, b2_ref, w2_ref, cmask_ref,
                        o_ref, acc_ref, *, H, W, c_out, nb):
    """bn1 -> relu1 -> conv1(1x1, bn2-scale folded) -> +bn2-shift -> relu2 ->
    conv2(3x3, pad=1).

    Per grid step:
      x_ref    : (nb, C_in, P)     unpadded input, P = H*W
      s1/b1    : (C_in, 1)         folded bn1 scale / shift (f32)
      w1_ref   : (C_mid, C_in)     conv1 weight with bn2 scale folded in
      b2_ref   : (C_mid, 1)        bn2 shift (f32)
      w2_ref   : (9*C_out, C_mid)  conv2 taps, row block t <-> (kh,kw)=divmod(t,3)
      cmask_ref: (2, P)            column-validity masks: row0=[w>=1], row1=[w<=W-2]
      o_ref    : (nb, C_out, P)
      acc_ref  : (C_out, P) f32 VMEM scratch accumulator
    """
    P = H * W
    for n in range(nb):                                       # static, small
        x = x_ref[n].astype(jnp.float32)                      # (C_in, P)

        # bn1 + relu1 in f32 on the VPU, then cast operands for the MXU.
        a1 = jnp.maximum(x * s1_ref[...] + b1_ref[...], 0.0).astype(w1_ref.dtype)

        # conv1 (1x1) in transposed form: (C_mid, C_in) @ (C_in, P) -> (C_mid, P).
        # bn2's scale is already folded into w1; only the shift remains.
        z = jnp.dot(w1_ref[...], a1, preferred_element_type=jnp.float32)
        a2 = jnp.maximum(z + b2_ref[...], 0.0).astype(w2_ref.dtype)

        # conv2 (3x3, pad=1): ONE MXU dot covering all 9 taps ...
        y = jnp.dot(w2_ref[...], a2, preferred_element_type=jnp.float32)  # (9*C_out, P)

        # ... then shift-and-accumulate the 9 tap blocks on the small result.
        # Tap (kh,kw) adds y_t[:, p + d] to output p, with d = (kh-1)*W + (kw-1),
        # valid only where the source pixel lies inside the image:
        #   - flat out-of-range sources  -> excluded by the output range [lo,hi)
        #   - row-edge wrap (source column off the image) -> tiny column mask
        # The centre tap (t=4) needs neither shift nor mask: use it to init acc.
        acc_ref[...] = y[4 * c_out:5 * c_out, :]
        for t in (0, 1, 2, 3, 5, 6, 7, 8):
            kh, kw = divmod(t, 3)
            d = (kh - 1) * W + (kw - 1)                       # static flat offset
            lo, hi = (0, P - d) if d > 0 else (-d, P)         # valid output range
            src = y[t * c_out:(t + 1) * c_out, lo + d:hi + d]  # lane-shifted slice
            if kw != 1:                                        # needs a column mask
                m = 0 if kw == 0 else 1
                src = src * cmask_ref[m:m + 1, lo:hi]
            acc_ref[:, lo:hi] += src

        o_ref[n] = acc_ref[...].astype(o_ref.dtype)


# ---------------------------------------------------------------------------
# One-time (per layer) parameter preparation: BN folding, re-layout, casting.
# ---------------------------------------------------------------------------
def prepare_params(params, compute_dtype=jnp.bfloat16):
    w1 = params["conv1_w"]          # (C_mid, C_in, 1, 1)  PyTorch OIHW
    w2 = params["conv2_w"]          # (C_out, C_mid, 3, 3) PyTorch OIHW
    C_mid, C_in = w1.shape[0], w1.shape[1]
    C_out = w2.shape[0]

    s1 = params["bn1_gamma"] / jnp.sqrt(params["bn1_var"] + EPS)
    b1 = params["bn1_beta"] - params["bn1_mean"] * s1
    s2 = params["bn2_gamma"] / jnp.sqrt(params["bn2_var"] + EPS)
    b2 = params["bn2_beta"] - params["bn2_mean"] * s2

    # bn2 is linear and follows conv1 directly -> fold its scale into w1.
    w1_folded = (w1[:, :, 0, 0] * s2[:, None]).astype(compute_dtype)    # (C_mid, C_in)
    # (C_out, C_mid, 3, 3) -> (kh, kw, C_out, C_mid) -> (9*C_out, C_mid)
    w2_taps = jnp.transpose(w2, (2, 3, 0, 1)).reshape(9 * C_out, C_mid)
    w2_taps = w2_taps.astype(compute_dtype)

    return {
        "s1": s1.reshape(C_in, 1).astype(jnp.float32),
        "b1": b1.reshape(C_in, 1).astype(jnp.float32),
        "w1": w1_folded,
        "b2": b2.reshape(C_mid, 1).astype(jnp.float32),
        "w2": w2_taps,
    }


def _col_masks(H, W):
    """(2, H*W) constant: row 0 zeroes output columns whose (kw=0) source column
    w-1 is off the image; row 1 likewise for (kw=2) source column w+1."""
    m = np.ones((2, H, W), np.float32)
    m[0, :, 0] = 0.0
    m[1, :, W - 1] = 0.0
    return jnp.asarray(m.reshape(2, H * W))


def _vmem_limit_bytes():
    """Generation-aware budget: ~3/4 of physical VMEM, capped at 100 MiB.
    v7x (64 MiB phys) -> 48 MiB; v5e/v6e (128 MiB phys) -> 96 MiB."""
    try:
        cap = int(pltpu.get_tpu_info().vmem_capacity_bytes)
    except Exception:
        cap = 64 * 1024 * 1024
    return int(min(cap * 3 // 4, 100 * 1024 * 1024))


# ---------------------------------------------------------------------------
# Forward: NCHW in, NCHW out.  The only wrapper ops are two free reshapes.
# ---------------------------------------------------------------------------
@functools.partial(jax.jit, static_argnames=("images_per_step", "out_dtype"))
def dense_layer_forward(x_nchw, prep, images_per_step=1, out_dtype=jnp.float32):
    N, C_in, H, W = x_nchw.shape
    C_mid = prep["w1"].shape[0]
    C_out = prep["w2"].shape[0] // 9
    P = H * W

    # Images per grid step: >1 amortises per-step overhead for small-spatial
    # stages; keep N // nb >= 2 when possible so both v7x TensorCores get work.
    nb = images_per_step if (0 < images_per_step <= N and N % images_per_step == 0) else 1

    x_flat = x_nchw.reshape(N, C_in, P)          # free, contiguous reshape
    cmask = _col_masks(H, W)                     # tiny constant, fetched once

    kernel = functools.partial(_dense_layer_kernel, H=H, W=W, c_out=C_out, nb=nb)

    out_flat = pl.pallas_call(
        kernel,
        out_shape=jax.ShapeDtypeStruct((N, C_out, P), out_dtype),
        grid_spec=pltpu.PrefetchScalarGridSpec(
            num_scalar_prefetch=0,
            grid=(N // nb,),                                         # image blocks
            in_specs=[
                pl.BlockSpec((nb, C_in, P), lambda n: (n, 0, 0)),    # x (unpadded)
                pl.BlockSpec((C_in, 1), lambda n: (0, 0)),           # bn1 scale
                pl.BlockSpec((C_in, 1), lambda n: (0, 0)),           # bn1 shift
                pl.BlockSpec((C_mid, C_in), lambda n: (0, 0)),       # w1 (bn2-folded)
                pl.BlockSpec((C_mid, 1), lambda n: (0, 0)),          # bn2 shift
                pl.BlockSpec((9 * C_out, C_mid), lambda n: (0, 0)),  # w2 taps
                pl.BlockSpec((2, P), lambda n: (0, 0)),              # col masks
            ],
            out_specs=pl.BlockSpec((nb, C_out, P), lambda n: (n, 0, 0)),
            scratch_shapes=[pltpu.VMEM((C_out, P), jnp.float32)],    # f32 accumulator
        ),
        compiler_params=pltpu.CompilerParams(
            dimension_semantics=("parallel",),    # shards image blocks over TCs
            vmem_limit_bytes=_vmem_limit_bytes(),
        ),
    )(x_flat, prep["s1"], prep["b1"], prep["w1"], prep["b2"], prep["w2"], cmask)

    # TODO(synk): drop_rate > 0 in training mode (F.dropout) not implemented;
    # this path matches eval-mode / drop_rate=0 semantics (identity).
    # TODO(synk): for N == 1 on v7x, add a second "parallel" grid axis over
    # row bands (1-row halo) so both TensorCores get work.

    # (N, C_out, H*W) -> (N, C_out, H, W): contiguous, free reshape; no slice.
    return out_flat.reshape(N, C_out, H, W)


# ---------------------------------------------------------------------------
# Parameter init + pure-JAX reference for the correctness check.
# ---------------------------------------------------------------------------
def init_params(key, num_input_features, growth_rate, bn_size):
    C_in = num_input_features
    C_mid = bn_size * growth_rate
    C_out = growth_rate
    ks = jax.random.split(key, 10)
    return {
        "bn1_gamma": jax.random.uniform(ks[0], (C_in,), jnp.float32, 0.5, 1.5),
        "bn1_beta":  jax.random.normal(ks[1], (C_in,), jnp.float32) * 0.1,
        "bn1_mean":  jax.random.normal(ks[2], (C_in,), jnp.float32) * 0.1,
        "bn1_var":   jax.random.uniform(ks[3], (C_in,), jnp.float32, 0.5, 1.5),
        "conv1_w":   jax.random.normal(ks[4], (C_mid, C_in, 1, 1), jnp.float32) * 0.1,
        "bn2_gamma": jax.random.uniform(ks[5], (C_mid,), jnp.float32, 0.5, 1.5),
        "bn2_beta":  jax.random.normal(ks[6], (C_mid,), jnp.float32) * 0.1,
        "bn2_mean":  jax.random.normal(ks[7], (C_mid,), jnp.float32) * 0.1,
        "bn2_var":   jax.random.uniform(ks[8], (C_mid,), jnp.float32, 0.5, 1.5),
        "conv2_w":   jax.random.normal(ks[9], (C_out, C_mid, 3, 3), jnp.float32) * 0.1,
    }


def _reference_forward(x_nchw, params):
    s1 = params["bn1_gamma"] / jnp.sqrt(params["bn1_var"] + EPS)
    b1 = params["bn1_beta"] - params["bn1_mean"] * s1
    s2 = params["bn2_gamma"] / jnp.sqrt(params["bn2_var"] + EPS)
    b2 = params["bn2_beta"] - params["bn2_mean"] * s2
    a = jnp.maximum(x_nchw * s1[None, :, None, None] + b1[None, :, None, None], 0.0)
    y = jax.lax.conv_general_dilated(
        a, params["conv1_w"], (1, 1), "VALID",
        dimension_numbers=("NCHW", "OIHW", "NCHW"),
        precision=jax.lax.Precision.HIGHEST)
    a2 = jnp.maximum(y * s2[None, :, None, None] + b2[None, :, None, None], 0.0)
    out = jax.lax.conv_general_dilated(
        a2, params["conv2_w"], (1, 1), ((1, 1), (1, 1)),
        dimension_numbers=("NCHW", "OIHW", "NCHW"),
        precision=jax.lax.Precision.HIGHEST)
    return out


if __name__ == "__main__":
    # Small shapes consistent with the module: num_input_features=4,
    # growth_rate=8, bn_size=4, drop_rate=0.0
    N, C_in, H, W = 2, 4, 16, 16
    growth_rate, bn_size = 8, 4

    key = jax.random.PRNGKey(0)
    k_x, k_p = jax.random.split(key)
    x = jax.random.normal(k_x, (N, C_in, H, W), jnp.float32)
    params = init_params(k_p, C_in, growth_rate, bn_size)

    ref = _reference_forward(x, params)

    # (a) Structural check with f32 matmul operands (tight tolerance).
    prep_f32 = prepare_params(params, compute_dtype=jnp.float32)
    out_f32 = jax.block_until_ready(dense_layer_forward(x, prep_f32))
    assert out_f32.shape == (N, growth_rate, H, W), out_f32.shape
    assert jnp.allclose(out_f32, ref, atol=1e-3, rtol=1e-3), "f32 mismatch vs reference"

    # (b) Default fast path: bf16 matmul operands, f32 accumulation, f32 output.
    prep_bf16 = prepare_params(params, compute_dtype=jnp.bfloat16)
    out_bf16 = jax.block_until_ready(dense_layer_forward(x, prep_bf16))
    assert out_bf16.shape == (N, growth_rate, H, W), out_bf16.shape
    assert jnp.allclose(out_bf16, ref, atol=5e-2, rtol=5e-2), "bf16 mismatch vs reference"

    # (c) Multiple images per grid step (small-spatial DenseNet stages).
    out_nb2 = jax.block_until_ready(
        dense_layer_forward(x, prep_bf16, images_per_step=2))
    assert jnp.allclose(out_nb2, ref, atol=5e-2, rtol=5e-2), "nb=2 mismatch vs reference"

    # (d) HBM-lean I/O: bf16 input + bf16 output.
    out_b16io = jax.block_until_ready(
        dense_layer_forward(x.astype(jnp.bfloat16), prep_bf16,
                            out_dtype=jnp.bfloat16))
    assert out_b16io.dtype == jnp.bfloat16
    assert jnp.allclose(out_b16io.astype(jnp.float32), ref, atol=1e-1, rtol=1e-1), \
        "bf16-I/O mismatch vs reference"

    print("KERNEL_OK")
</pallas_src>

<mosaic_0001>
module attributes {stable_mosaic.version = 11 : i64} {
  func.func @_dense_layer_kernel(%arg0: i32, %arg1: memref<1x4x256xf32, #tpu.memory_space<vmem>>, %arg2: memref<4x1xf32, #tpu.memory_space<vmem>>, %arg3: memref<4x1xf32, #tpu.memory_space<vmem>>, %arg4: memref<32x4xf32, #tpu.memory_space<vmem>>, %arg5: memref<32x1xf32, #tpu.memory_space<vmem>>, %arg6: memref<72x32xf32, #tpu.memory_space<vmem>>, %arg7: memref<2x256xf32, #tpu.memory_space<vmem>>, %arg8: memref<1x8x256xf32, #tpu.memory_space<vmem>>, %arg9: memref<8x256xf32, #tpu.memory_space<vmem>>) attributes {dimension_semantics = [#tpu.dimension_semantics<parallel>], iteration_bounds = array<i64: 2>, scalar_prefetch = 0 : i64, scratch_operands = 1 : i64, tpu.core_type = #tpu.core_type<tc>, window_params = [{transform_indices = @transform_0, window_bounds = array<i64: 1, 4, 256>}, {pipeline_mode = #tpu.pipeline_mode<synchronous>, transform_indices = @transform_1, window_bounds = array<i64: 4, 1>}, {pipeline_mode = #tpu.pipeline_mode<synchronous>, transform_indices = @transform_2, window_bounds = array<i64: 4, 1>}, {pipeline_mode = #tpu.pipeline_mode<synchronous>, transform_indices = @transform_3, window_bounds = array<i64: 32, 4>}, {pipeline_mode = #tpu.pipeline_mode<synchronous>, transform_indices = @transform_4, window_bounds = array<i64: 32, 1>}, {pipeline_mode = #tpu.pipeline_mode<synchronous>, transform_indices = @transform_5, window_bounds = array<i64: 72, 32>}, {pipeline_mode = #tpu.pipeline_mode<synchronous>, transform_indices = @transform_6, window_bounds = array<i64: 2, 256>}, {transform_indices = @transform_7, window_bounds = array<i64: 1, 8, 256>}]} {
    %c0 = arith.constant 0 : index
    %c0_0 = arith.constant 0 : index
    %c0_1 = arith.constant 0 : index
    %0 = vector.load %arg1[%c0, %c0_0, %c0_1] : memref<1x4x256xf32, #tpu.memory_space<vmem>>, vector<1x4x256xf32>
    %1 = vector.shape_cast %0 : vector<1x4x256xf32> to vector<4x256xf32>
    %c0_2 = arith.constant 0 : index
    %c0_3 = arith.constant 0 : index
    %2 = vector.load %arg2[%c0_2, %c0_3] : memref<4x1xf32, #tpu.memory_space<vmem>>, vector<4x1xf32>
    %3 = vector.broadcast %2 : vector<4x1xf32> to vector<4x256xf32>
    %4 = arith.mulf %1, %3 : vector<4x256xf32>
    %c0_4 = arith.constant 0 : index
    %c0_5 = arith.constant 0 : index
    %5 = vector.load %arg3[%c0_4, %c0_5] : memref<4x1xf32, #tpu.memory_space<vmem>>, vector<4x1xf32>
    %6 = vector.broadcast %5 : vector<4x1xf32> to vector<4x256xf32>
    %7 = arith.addf %4, %6 : vector<4x256xf32>
    %cst = arith.constant 0.000000e+00 : f32
    %8 = vector.broadcast %cst : f32 to vector<4x256xf32>
    %9 = arith.maximumf %7, %8 : vector<4x256xf32>
    %c0_6 = arith.constant 0 : index
    %c0_7 = arith.constant 0 : index
    %10 = vector.load %arg4[%c0_6, %c0_7] : memref<32x4xf32, #tpu.memory_space<vmem>>, vector<32x4xf32>
    %cst_8 = arith.constant dense<0.000000e+00> : vector<32x256xf32>
    %11 = tpu.matmul %10, %9, %cst_8 {dimension_numbers = #tpu.dot_dimension_numbers<[1], [0], [0], [1], [0, 0, 1, 1], [], []>} : vector<32x4xf32>, vector<4x256xf32>, vector<32x256xf32> -> vector<32x256xf32>
    %c0_9 = arith.constant 0 : index
    %c0_10 = arith.constant 0 : index
    %12 = vector.load %arg5[%c0_9, %c0_10] : memref<32x1xf32, #tpu.memory_space<vmem>>, vector<32x1xf32>
    %13 = vector.broadcast %12 : vector<32x1xf32> to vector<32x256xf32>
    %14 = arith.addf %11, %13 : vector<32x256xf32>
    %cst_11 = arith.constant 0.000000e+00 : f32
    %15 = vector.broadcast %cst_11 : f32 to vector<32x256xf32>
    %16 = arith.maximumf %14, %15 : vector<32x256xf32>
    %c0_12 = arith.constant 0 : index
    %c0_13 = arith.constant 0 : index
    %17 = vector.load %arg6[%c0_12, %c0_13] : memref<72x32xf32, #tpu.memory_space<vmem>>, vector<72x32xf32>
    %cst_14 = arith.constant dense<0.000000e+00> : vector<72x256xf32>
    %18 = tpu.matmul %17, %16, %cst_14 {dimension_numbers = #tpu.dot_dimension_numbers<[1], [0], [0], [1], [0, 0, 1, 1], [], []>} : vector<72x32xf32>, vector<32x256xf32>, vector<72x256xf32> -> vector<72x256xf32>
    %19 = vector.extract_strided_slice %18 {offsets = [32, 0], sizes = [8, 256], strides = [1, 1]} : vector<72x256xf32> to vector<8x256xf32>
    %c0_15 = arith.constant 0 : index
    %c0_16 = arith.constant 0 : index
    %20 = vector.load %arg9[%c0_15, %c0_16] : memref<8x256xf32, #tpu.memory_space<vmem>>, vector<8x256xf32>
    tpu.vector_store %arg9[%c0_15, %c0_16], %19 {strides = array<i32>} : memref<8x256xf32, #tpu.memory_space<vmem>>, vector<8x256xf32>,
    %21 = vector.extract_strided_slice %18 {offsets = [0, 0], sizes = [8, 239], strides = [1, 1]} : vector<72x256xf32> to vector<8x239xf32>
    %c0_17 = arith.constant 0 : index
    %c17 = arith.constant 17 : index
    %22 = vector.load %arg7[%c0_17, %c17] : memref<2x256xf32, #tpu.memory_space<vmem>>, vector<1x239xf32>
    %23 = vector.broadcast %22 : vector<1x239xf32> to vector<8x239xf32>
    %24 = arith.mulf %21, %23 : vector<8x239xf32>
    %c0_18 = arith.constant 0 : index
    %c17_19 = arith.constant 17 : index
    %25 = vector.load %arg9[%c0_18, %c17_19] : memref<8x256xf32, #tpu.memory_space<vmem>>, vector<8x239xf32>
    %26 = arith.addf %25, %24 : vector<8x239xf32>
    %c0_20 = arith.constant 0 : index
    %c17_21 = arith.constant 17 : index
    %27 = vector.load %arg9[%c0_20, %c17_21] : memref<8x256xf32, #tpu.memory_space<vmem>>, vector<8x239xf32>
    tpu.vector_store %arg9[%c0_20, %c17_21], %26 {strides = array<i32>} : memref<8x256xf32, #tpu.memory_space<vmem>>, vector<8x239xf32>,
    %28 = vector.extract_strided_slice %18 {offsets = [8, 0], sizes = [8, 240], strides = [1, 1]} : vector<72x256xf32> to vector<8x240xf32>
    %c0_22 = arith.constant 0 : index
    %c16 = arith.constant 16 : index
    %29 = vector.load %arg9[%c0_22, %c16] : memref<8x256xf32, #tpu.memory_space<vmem>>, vector<8x240xf32>
    %30 = arith.addf %29, %28 : vector<8x240xf32>
    %c0_23 = arith.constant 0 : index
    %c16_24 = arith.constant 16 : index
    %31 = vector.load %arg9[%c0_23, %c16_24] : memref<8x256xf32, #tpu.memory_space<vmem>>, vector<8x240xf32>
    tpu.vector_store %arg9[%c0_23, %c16_24], %30 {strides = array<i32>} : memref<8x256xf32, #tpu.memory_space<vmem>>, vector<8x240xf32>,
    %32 = vector.extract_strided_slice %18 {offsets = [16, 0], sizes = [8, 241], strides = [1, 1]} : vector<72x256xf32> to vector<8x241xf32>
    %c1 = arith.constant 1 : index
    %c15 = arith.constant 15 : index
    %33 = vector.load %arg7[%c1, %c15] : memref<2x256xf32, #tpu.memory_space<vmem>>, vector<1x241xf32>
    %34 = vector.broadcast %33 : vector<1x241xf32> to vector<8x241xf32>
    %35 = arith.mulf %32, %34 : vector<8x241xf32>
    %c0_25 = arith.constant 0 : index
    %c15_26 = arith.constant 15 : index
    %36 = vector.load %arg9[%c0_25, %c15_26] : memref<8x256xf32, #tpu.memory_space<vmem>>, vector<8x241xf32>
    %37 = arith.addf %36, %35 : vector<8x241xf32>
    %c0_27 = arith.constant 0 : index
    %c15_28 = arith.constant 15 : index
    %38 = vector.load %arg9[%c0_27, %c15_28] : memref<8x256xf32, #tpu.memory_space<vmem>>, vector<8x241xf32>
    tpu.vector_store %arg9[%c0_27, %c15_28], %37 {strides = array<i32>} : memref<8x256xf32, #tpu.memory_space<vmem>>, vector<8x241xf32>,
    %39 = vector.extract_strided_slice %18 {offsets = [24, 0], sizes = [8, 255], strides = [1, 1]} : vector<72x256xf32> to vector<8x255xf32>
    %c0_29 = arith.constant 0 : index
    %c1_30 = arith.constant 1 : index
    %40 = vector.load %arg7[%c0_29, %c1_30] : memref<2x256xf32, #tpu.memory_space<vmem>>, vector<1x255xf32>
    %41 = vector.broadcast %40 : vector<1x255xf32> to vector<8x255xf32>
    %42 = arith.mulf %39, %41 : vector<8x255xf32>
    %c0_31 = arith.constant 0 : index
    %c1_32 = arith.constant 1 : index
    %43 = vector.load %arg9[%c0_31, %c1_32] : memref<8x256xf32, #tpu.memory_space<vmem>>, vector<8x255xf32>
    %44 = arith.addf %43, %42 : vector<8x255xf32>
    %c0_33 = arith.constant 0 : index
    %c1_34 = arith.constant 1 : index
    %45 = vector.load %arg9[%c0_33, %c1_34] : memref<8x256xf32, #tpu.memory_space<vmem>>, vector<8x255xf32>
    tpu.vector_store %arg9[%c0_33, %c1_34], %44 {strides = array<i32>} : memref<8x256xf32, #tpu.memory_space<vmem>>, vector<8x255xf32>,
    %46 = vector.extract_strided_slice %18 {offsets = [40, 1], sizes = [8, 255], strides = [1, 1]} : vector<72x256xf32> to vector<8x255xf32>
    %c1_35 = arith.constant 1 : index
    %c0_36 = arith.constant 0 : index
    %47 = vector.load %arg7[%c1_35, %c0_36] : memref<2x256xf32, #tpu.memory_space<vmem>>, vector<1x255xf32>
    %48 = vector.broadcast %47 : vector<1x255xf32> to vector<8x255xf32>
    %49 = arith.mulf %46, %48 : vector<8x255xf32>
    %c0_37 = arith.constant 0 : index
    %c0_38 = arith.constant 0 : index
    %50 = vector.load %arg9[%c0_37, %c0_38] : memref<8x256xf32, #tpu.memory_space<vmem>>, vector<8x255xf32>
    %51 = arith.addf %50, %49 : vector<8x255xf32>
    %c0_39 = arith.constant 0 : index
    %c0_40 = arith.constant 0 : index
    %52 = vector.load %arg9[%c0_39, %c0_40] : memref<8x256xf32, #tpu.memory_space<vmem>>, vector<8x255xf32>
    tpu.vector_store %arg9[%c0_39, %c0_40], %51 {strides = array<i32>} : memref<8x256xf32, #tpu.memory_space<vmem>>, vector<8x255xf32>,
    %53 = vector.extract_strided_slice %18 {offsets = [48, 15], sizes = [8, 241], strides = [1, 1]} : vector<72x256xf32> to vector<8x241xf32>
    %c0_41 = arith.constant 0 : index
    %c0_42 = arith.constant 0 : index
    %54 = vector.load %arg7[%c0_41, %c0_42] : memref<2x256xf32, #tpu.memory_space<vmem>>, vector<1x241xf32>
    %55 = vector.broadcast %54 : vector<1x241xf32> to vector<8x241xf32>
    %56 = arith.mulf %53, %55 : vector<8x241xf32>
    %c0_43 = arith.constant 0 : index
    %c0_44 = arith.constant 0 : index
    %57 = vector.load %arg9[%c0_43, %c0_44] : memref<8x256xf32, #tpu.memory_space<vmem>>, vector<8x241xf32>
    %58 = arith.addf %57, %56 : vector<8x241xf32>
    %c0_45 = arith.constant 0 : index
    %c0_46 = arith.constant 0 : index
    %59 = vector.load %arg9[%c0_45, %c0_46] : memref<8x256xf32, #tpu.memory_space<vmem>>, vector<8x241xf32>
    tpu.vector_store %arg9[%c0_45, %c0_46], %58 {strides = array<i32>} : memref<8x256xf32, #tpu.memory_space<vmem>>, vector<8x241xf32>,
    %60 = vector.extract_strided_slice %18 {offsets = [56, 16], sizes = [8, 240], strides = [1, 1]} : vector<72x256xf32> to vector<8x240xf32>
    %c0_47 = arith.constant 0 : index
    %c0_48 = arith.constant 0 : index
    %61 = vector.load %arg9[%c0_47, %c0_48] : memref<8x256xf32, #tpu.memory_space<vmem>>, vector<8x240xf32>
    %62 = arith.addf %61, %60 : vector<8x240xf32>
    %c0_49 = arith.constant 0 : index
    %c0_50 = arith.constant 0 : index
    %63 = vector.load %arg9[%c0_49, %c0_50] : memref<8x256xf32, #tpu.memory_space<vmem>>, vector<8x240xf32>
    tpu.vector_store %arg9[%c0_49, %c0_50], %62 {strides = array<i32>} : memref<8x256xf32, #tpu.memory_space<vmem>>, vector<8x240xf32>,
    %64 = vector.extract_strided_slice %18 {offsets = [64, 17], sizes = [8, 239], strides = [1, 1]} : vector<72x256xf32> to vector<8x239xf32>
    %c1_51 = arith.constant 1 : index
    %c0_52 = arith.constant 0 : index
    %65 = vector.load %arg7[%c1_51, %c0_52] : memref<2x256xf32, #tpu.memory_space<vmem>>, vector<1x239xf32>
    %66 = vector.broadcast %65 : vector<1x239xf32> to vector<8x239xf32>
    %67 = arith.mulf %64, %66 : vector<8x239xf32>
    %c0_53 = arith.constant 0 : index
    %c0_54 = arith.constant 0 : index
    %68 = vector.load %arg9[%c0_53, %c0_54] : memref<8x256xf32, #tpu.memory_space<vmem>>, vector<8x239xf32>
    %69 = arith.addf %68, %67 : vector<8x239xf32>
    %c0_55 = arith.constant 0 : index
    %c0_56 = arith.constant 0 : index
    %70 = vector.load %arg9[%c0_55, %c0_56] : memref<8x256xf32, #tpu.memory_space<vmem>>, vector<8x239xf32>
    tpu.vector_store %arg9[%c0_55, %c0_56], %69 {strides = array<i32>} : memref<8x256xf32, #tpu.memory_space<vmem>>, vector<8x239xf32>,
    %c0_57 = arith.constant 0 : index
    %c0_58 = arith.constant 0 : index
    %71 = vector.load %arg9[%c0_57, %c0_58] : memref<8x256xf32, #tpu.memory_space<vmem>>, vector<8x256xf32>
    %c0_59 = arith.constant 0 : index
    %c0_60 = arith.constant 0 : index
    %c0_61 = arith.constant 0 : index
    %72 = vector.load %arg8[%c0_59, %c0_60, %c0_61] : memref<1x8x256xf32, #tpu.memory_space<vmem>>, vector<1x8x256xf32>
    %73 = vector.shape_cast %72 : vector<1x8x256xf32> to vector<8x256xf32>
    %74 = vector.shape_cast %71 : vector<8x256xf32> to vector<1x8x256xf32>
    tpu.vector_store %arg8[%c0_59, %c0_60, %c0_61], %74 {strides = array<i32>} : memref<1x8x256xf32, #tpu.memory_space<vmem>>, vector<1x8x256xf32>,
    return
  }
  func.func @transform_0(%arg0: i32) -> (i32, i32, i32) {
    %c0_i32 = arith.constant 0 : i32
    %c0_i32_0 = arith.constant 0 : i32
    %c0_i32_1 = arith.constant 0 : i32
    return %arg0, %c0_i32, %c0_i32_0 : i32, i32, i32
  }
  func.func @transform_1(%arg0: i32) -> (i32, i32) {
    %c0_i32 = arith.constant 0 : i32
    %c0_i32_0 = arith.constant 0 : i32
    %c0_i32_1 = arith.constant 0 : i32
    return %c0_i32, %c0_i32_0 : i32, i32
  }
  func.func @transform_2(%arg0: i32) -> (i32, i32) {
    %c0_i32 = arith.constant 0 : i32
    %c0_i32_0 = arith.constant 0 : i32
    %c0_i32_1 = arith.constant 0 : i32
    return %c0_i32, %c0_i32_0 : i32, i32
  }
  func.func @transform_3(%arg0: i32) -> (i32, i32) {
    %c0_i32 = arith.constant 0 : i32
    %c0_i32_0 = arith.constant 0 : i32
    %c0_i32_1 = arith.constant 0 : i32
    return %c0_i32, %c0_i32_0 : i32, i32
  }
  func.func @transform_4(%arg0: i32) -> (i32, i32) {
    %c0_i32 = arith.constant 0 : i32
    %c0_i32_0 = arith.constant 0 : i32
    %c0_i32_1 = arith.constant 0 : i32
    return %c0_i32, %c0_i32_0 : i32, i32
  }
  func.func @transform_5(%arg0: i32) -> (i32, i32) {
    %c0_i32 = arith.constant 0 : i32
    %c0_i32_0 = arith.constant 0 : i32
    %c0_i32_1 = arith.constant 0 : i32
    return %c0_i32, %c0_i32_0 : i32, i32
  }
  func.func @transform_6(%arg0: i32) -> (i32, i32) {
    %c0_i32 = arith.constant 0 : i32
    %c0_i32_0 = arith.constant 0 : i32
    %c0_i32_1 = arith.constant 0 : i32
    return %c0_i32, %c0_i32_0 : i32, i32
  }
  func.func @transform_7(%arg0: i32) -> (i32, i32, i32) {
    %c0_i32 = arith.constant 0 : i32
    %c0_i32_0 = arith.constant 0 : i32
    %c0_i32_1 = arith.constant 0 : i32
    return %arg0, %c0_i32, %c0_i32_0 : i32, i32, i32
  }
}

</mosaic_0001>

<llo_original>
// kernel: dense_layer_forward.1
$region0: #{dense_layer_forward.1}
  #allocation0 [shape = 'u32[]', space=smem, size = 0x4, offset = 0x4, fixed_abs, tag = 'smem constant byte address 0x4 - core index']
  #allocation1 [shape = 'u32[144,128]{1,0:T(1,128)}', space=vmem, size = 0x12000, scoped, tag = 'internal scratch']
  #allocation2 [shape = 'f32[8,256]{1,0:T(8,128)}', space=vmem, size = 0x2000, scoped, tag = 'scratch operand']
  %s0 = inlined_call_operand.vmem [shape: f32[2,4,256], index: 0, kind: input, shape index: {}]
  %s1 = inlined_call_operand.vmem [shape: f32[4,1], index: 1, kind: input, shape index: {}]
  %s2 = inlined_call_operand.vmem [shape: f32[4,1], index: 2, kind: input, shape index: {}]
  %s3 = inlined_call_operand.vmem [shape: f32[32,4], index: 3, kind: input, shape index: {}]
  %s4 = inlined_call_operand.vmem [shape: f32[32,1], index: 4, kind: input, shape index: {}]
  %s5 = inlined_call_operand.vmem [shape: f32[72,32], index: 5, kind: input, shape index: {}]
  %s6 = inlined_call_operand.vmem [shape: f32[2,256], index: 6, kind: input, shape index: {}]
  %s7 = inlined_call_operand.vmem [shape: f32[2,8,256], index: 7, kind: output, shape index: {}]
  %s8 = sld [smem:[#allocation0]]
  $region61: #{dense_layer_forward.1} parent=0
    _
  %s10 = ssub.s32 1, %s8
  %s11 = scalar_select 0, %s10, %s8
  loop: start=0, step=1, limit=4
  $region2: #{dense_layer_forward.1} parent=0 // loop_pre_header
    _
  $region3: #{dense_layer_forward.1} parent=0 // loop_header
    %s13 = sphi 0, %s17
    %p14 = scmp.ge.s32.totalorder %s13, 4
    %s23 = sphi 0, %s25
    %s26 = sphi 0, %s23
    %s27 = sphi 0, %s26
    %s43 = sphi 0, %s27
    %s47 = sphi 0, %s47
    %s49 = sphi 0, %s47
    %s50 = sphi 0, %s49
    %s64 = sphi 0, %s50
    %s68 = sphi 0, %s68
    %s70 = sphi 0, %s68
    %s71 = sphi 0, %s70
    %s85 = sphi 0, %s71
    %s89 = sphi 0, %s89
    %s91 = sphi 0, %s89
    %s92 = sphi 0, %s91
    %s106 = sphi 0, %s92
    %s110 = sphi 0, %s110
    %s112 = sphi 0, %s110
    %s113 = sphi 0, %s112
    %s127 = sphi 0, %s113
    %s131 = sphi 0, %s131
    %s133 = sphi 0, %s131
    %s134 = sphi 0, %s133
    %s148 = sphi 0, %s134
    %s152 = sphi 0, %s152
    %s154 = sphi 0, %s152
    %s155 = sphi 0, %s154
    %s169 = sphi 0, %s155
    %s175 = sphi 0, %s177
    %s178 = sphi 0, %s175
    %s179 = sphi 0, %s178
    %s195 = sphi 0, %s179
  $region4: #{dense_layer_forward.1} parent=0 // loop_header_branch
    %16 = sbr.rel (%p14) target = $region8
  $region5: #{dense_layer_forward.1} parent=0 // loop_body
    %s18 = ssub.s32 %s13, 1
    %s19 = ssub.s32 %s13, 2
    %s20 = sadd.s32 %s13, 1
    %s21 = ssub.s32 %s13, %s20
    %p22 = scmp.eq.s32.totalorder %s21, 0
    %s24 = sadd.s32 %s23, 1
    %s25 = scalar_select %p22, %s23, %s24
    %p28 = pneg %p22
    %p29 = scmp.eq.s32.totalorder %s13, 1
    %p30 = por %p28, %p29
    %p31 = scmp.ne.s32.totalorder %s23, %s26
    %p32 = scmp.eq.s32.totalorder %s13, 0
    %p33 = por %p31, %p32
    %p34 = scmp.ne.s32.totalorder %s23, %s26
    %p35 = scmp.eq.s32.totalorder %s18, 1
    %p36 = por %p34, %p35
    %p37 = scmp.ne.s32.totalorder %s26, %s27
    %p38 = scmp.eq.s32.totalorder %s18, 0
    %p39 = por %p37, %p38
    %p40 = scmp.ne.s32.totalorder %s26, %s27
    %p41 = scmp.eq.s32.totalorder %s19, 1
    %p42 = por %p40, %p41
    %p44 = scmp.ne.s32.totalorder %s27, %s43
    %p45 = scmp.eq.s32.totalorder %s19, 0
    %p46 = por %p44, %p45
    %s48 = sadd.s32 %s47, 1
    %p51 = scmp.eq.s32.totalorder %s13, 1
    %p52 = scmp.ne.s32.totalorder %s47, %s49
    %p53 = scmp.eq.s32.totalorder %s13, 0
    %p54 = por %p52, %p53
    %p55 = scmp.ne.s32.totalorder %s47, %s49
    %p56 = scmp.eq.s32.totalorder %s18, 1
    %p57 = por %p55, %p56
    %p58 = scmp.ne.s32.totalorder %s49, %s50
    %p59 = scmp.eq.s32.totalorder %s18, 0
    %p60 = por %p58, %p59
    %p61 = scmp.ne.s32.totalorder %s49, %s50
    %p62 = scmp.eq.s32.totalorder %s19, 1
    %p63 = por %p61, %p62
    %p65 = scmp.ne.s32.totalorder %s50, %s64
    %p66 = scmp.eq.s32.totalorder %s19, 0
    %p67 = por %p65, %p66
    %s69 = sadd.s32 %s68, 1
    %p72 = scmp.eq.s32.totalorder %s13, 1
    %p73 = scmp.ne.s32.totalorder %s68, %s70
    %p74 = scmp.eq.s32.totalorder %s13, 0
    %p75 = por %p73, %p74
    %p76 = scmp.ne.s32.totalorder %s68, %s70
    %p77 = scmp.eq.s32.totalorder %s18, 1
    %p78 = por %p76, %p77
    %p79 = scmp.ne.s32.totalorder %s70, %s71
    %p80 = scmp.eq.s32.totalorder %s18, 0
    %p81 = por %p79, %p80
    %p82 = scmp.ne.s32.totalorder %s70, %s71
    %p83 = scmp.eq.s32.totalorder %s19, 1
    %p84 = por %p82, %p83
    %p86 = scmp.ne.s32.totalorder %s71, %s85
    %p87 = scmp.eq.s32.totalorder %s19, 0
    %p88 = por %p86, %p87
    %s90 = sadd.s32 %s89, 1
    %p93 = scmp.eq.s32.totalorder %s13, 1
    %p94 = scmp.ne.s32.totalorder %s89, %s91
    %p95 = scmp.eq.s32.totalorder %s13, 0
    %p96 = por %p94, %p95
    %p97 = scmp.ne.s32.totalorder %s89, %s91
    %p98 = scmp.eq.s32.totalorder %s18, 1
    %p99 = por %p97, %p98
    %p100 = scmp.ne.s32.totalorder %s91, %s92
    %p101 = scmp.eq.s32.totalorder %s18, 0
    %p102 = por %p100, %p101
    %p103 = scmp.ne.s32.totalorder %s91, %s92
    %p104 = scmp.eq.s32.totalorder %s19, 1
    %p105 = por %p103, %p104
    %p107 = scmp.ne.s32.totalorder %s92, %s106
    %p108 = scmp.eq.s32.totalorder %s19, 0
    %p109 = por %p107, %p108
    %s111 = sadd.s32 %s110, 1
    %p114 = scmp.eq.s32.totalorder %s13, 1
    %p115 = scmp.ne.s32.totalorder %s110, %s112
    %p116 = scmp.eq.s32.totalorder %s13, 0
    %p117 = por %p115, %p116
    %p118 = scmp.ne.s32.totalorder %s110, %s112
    %p119 = scmp.eq.s32.totalorder %s18, 1
    %p120 = por %p118, %p119
    %p121 = scmp.ne.s32.totalorder %s112, %s113
    %p122 = scmp.eq.s32.totalorder %s18, 0
    %p123 = por %p121, %p122
    %p124 = scmp.ne.s32.totalorder %s112, %s113
    %p125 = scmp.eq.s32.totalorder %s19, 1
    %p126 = por %p124, %p125
    %p128 = scmp.ne.s32.totalorder %s113, %s127
    %p129 = scmp.eq.s32.totalorder %s19, 0
    %p130 = por %p128, %p129
    %s132 = sadd.s32 %s131, 1
    %p135 = scmp.eq.s32.totalorder %s13, 1
    %p136 = scmp.ne.s32.totalorder %s131, %s133
    %p137 = scmp.eq.s32.totalorder %s13, 0
    %p138 = por %p136, %p137
    %p139 = scmp.ne.s32.totalorder %s131, %s133
    %p140 = scmp.eq.s32.totalorder %s18, 1
    %p141 = por %p139, %p140
    %p142 = scmp.ne.s32.totalorder %s133, %s134
    %p143 = scmp.eq.s32.totalorder %s18, 0
    %p144 = por %p142, %p143
    %p145 = scmp.ne.s32.totalorder %s133, %s134
    %p146 = scmp.eq.s32.totalorder %s19, 1
    %p147 = por %p145, %p146
    %p149 = scmp.ne.s32.totalorder %s134, %s148
    %p150 = scmp.eq.s32.totalorder %s19, 0
    %p151 = por %p149, %p150
    %s153 = sadd.s32 %s152, 1
    %p156 = scmp.eq.s32.totalorder %s13, 1
    %p157 = scmp.ne.s32.totalorder %s152, %s154
    %p158 = scmp.eq.s32.totalorder %s13, 0
    %p159 = por %p157, %p158
    %p160 = scmp.ne.s32.totalorder %s152, %s154
    %p161 = scmp.eq.s32.totalorder %s18, 1
    %p162 = por %p160, %p161
    %p163 = scmp.ne.s32.totalorder %s154, %s155
    %p164 = scmp.eq.s32.totalorder %s18, 0
    %p165 = por %p163, %p164
    %p166 = scmp.ne.s32.totalorder %s154, %s155
    %p167 = scmp.eq.s32.totalorder %s19, 1
    %p168 = por %p166, %p167
    %p170 = scmp.ne.s32.totalorder %s155, %s169
    %p171 = scmp.eq.s32.totalorder %s19, 0
    %p172 = por %p170, %p171
    %s173 = ssub.s32 %s13, %s20
    %p174 = scmp.eq.s32.totalorder %s173, 0
    %s176 = sadd.s32 %s175, 1
    %s177 = scalar_select %p174, %s175, %s176
    %p180 = pneg %p174
    %p181 = scmp.eq.s32.totalorder %s13, 1
    %p182 = por %p180, %p181
    %p183 = scmp.ne.s32.totalorder %s175, %s178
    %p184 = scmp.eq.s32.totalorder %s13, 0
    %p185 = por %p183, %p184
    %p186 = scmp.ne.s32.totalorder %s175, %s178
    %p187 = scmp.eq.s32.totalorder %s18, 1
    %p188 = por %p186, %p187
    %p189 = scmp.ne.s32.totalorder %s178, %s179
    %p190 = scmp.eq.s32.totalorder %s18, 0
    %p191 = por %p189, %p190
    %p192 = scmp.ne.s32.totalorder %s178, %s179
    %p193 = scmp.eq.s32.totalorder %s19, 1
    %p194 = por %p192, %p193
    %p196 = scmp.ne.s32.totalorder %s179, %s195
    %p197 = scmp.eq.s32.totalorder %s19, 0
    %p198 = por %p196, %p197
    %p199 = scmp.le.s32.totalorder 1, %s13
    %p200 = scmp.lt.s32.totalorder %s13, 3
    %p201 = pnand %p199, %p200
    %p202 = pneg %p201
    // Predicated region
    $region9: #{dense_layer_forward.1} parent=5 // pred_check
      _
    $region10: #{dense_layer_forward.1} parent=5 // pred_check_branch
      %204 = sbr.rel (%p201) target = $region12
    $region11: #{dense_layer_forward.1} parent=5 // pred_region
      %s205 = ssub.s32 %s13, 1
      // Predicated region
      $region13: #{dense_layer_forward.1} parent=11 // pred_check
        %p206 = pneg %p60
      $region14: #{dense_layer_forward.1} parent=11 // pred_check_branch
        %208 = sbr.rel (%p206) target = $region16
      $region15: #{dense_layer_forward.1} parent=11 // pred_region
        _
      $region16: #{dense_layer_forward.1} parent=11 // pred_fallthru
        _
      // Predicated region
      $region17: #{dense_layer_forward.1} parent=11 // pred_check
        %p209 = pneg %p81
      $region18: #{dense_layer_forward.1} parent=11 // pred_check_branch
        %211 = sbr.rel (%p209) target = $region20
      $region19: #{dense_layer_forward.1} parent=11 // pred_region
        _
      $region20: #{dense_layer_forward.1} parent=11 // pred_fallthru
        _
      // Predicated region
      $region21: #{dense_layer_forward.1} parent=11 // pred_check
        %p212 = pneg %p102
      $region22: #{dense_layer_forward.1} parent=11 // pred_check_branch
        %214 = sbr.rel (%p212) target = $region24
      $region23: #{dense_layer_forward.1} parent=11 // pred_region
        _
      $region24: #{dense_layer_forward.1} parent=11 // pred_fallthru
        _
      // Predicated region
      $region25: #{dense_layer_forward.1} parent=11 // pred_check
        %p215 = pneg %p123
      $region26: #{dense_layer_forward.1} parent=11 // pred_check_branch
        %217 = sbr.rel (%p215) target = $region28
      $region27: #{dense_layer_forward.1} parent=11 // pred_region
        _
      $region28: #{dense_layer_forward.1} parent=11 // pred_fallthru
        _
      // Predicated region
      $region29: #{dense_layer_forward.1} parent=11 // pred_check
        %p218 = pneg %p144
      $region30: #{dense_layer_forward.1} parent=11 // pred_check_branch
        %220 = sbr.rel (%p218) target = $region32
      $region31: #{dense_layer_forward.1} parent=11 // pred_region
        _
      $region32: #{dense_layer_forward.1} parent=11 // pred_fallthru
        _
      // Predicated region
      $region33: #{dense_layer_forward.1} parent=11 // pred_check
        %p221 = pneg %p165
      $region34: #{dense_layer_forward.1} parent=11 // pred_check_branch
        %223 = sbr.rel (%p221) target = $region36
      $region35: #{dense_layer_forward.1} parent=11 // pred_region
        _
      $region36: #{dense_layer_forward.1} parent=11 // pred_fallthru
        _
    $region12: #{dense_layer_forward.1} parent=5 // pred_fallthru
      _
    %p224 = scmp.lt.s32.totalorder %s13, 2
    // Predicated region
    $region37: #{dense_layer_forward.1} parent=5 // pred_check
      %p225 = pneg %p224
    $region38: #{dense_layer_forward.1} parent=5 // pred_check_branch
      %227 = sbr.rel (%p225) target = $region40
    $region39: #{dense_layer_forward.1} parent=5 // pred_region
      // Predicated region
      $region41: #{dense_layer_forward.1} parent=39 // pred_check
        %p228 = pneg %p33
      $region42: #{dense_layer_forward.1} parent=39 // pred_check_branch
        %230 = sbr.rel (%p228) target = $region44
      $region43: #{dense_layer_forward.1} parent=39 // pred_region
        %p231 = scmp.lt.s32.totalorder %s13, 1
        %s232 = scalar_select %p231, %s13, 1
        %s233 = smul.addr %s232, 2
        %s234 = smul.addr %s233, 4
        %s235 = scalar_lea.vmem %s0, %s234
      $region44: #{dense_layer_forward.1} parent=39 // pred_fallthru
        _
    $region40: #{dense_layer_forward.1} parent=5 // pred_fallthru
      _
    %p236 = scmp.le.s32.totalorder 1, %s13
    %p237 = scmp.lt.s32.totalorder %s13, 3
    %p238 = pnand %p236, %p237
    %p239 = pneg %p238
    // Predicated region
    $region45: #{dense_layer_forward.1} parent=5 // pred_check
      _
    $region46: #{dense_layer_forward.1} parent=5 // pred_check_branch
      %241 = sbr.rel (%p238) target = $region48
    $region47: #{dense_layer_forward.1} parent=5 // pred_region
      %s242 = ssub.s32 %s13, 1
      %p243 = scmp.lt.s32.totalorder %s18, 1
      %s244 = scalar_select %p243, %s18, 1
      %s245 = smul.addr %s244, 2
      %s246 = smul.addr %s245, 4
      %s247 = scalar_lea.vmem %s0, %s246
      %p248 = pneg %p39
      %p249 = pneg %p36
      %p250 = pneg %p60
      %p251 = pneg %p57
      %p252 = pneg %p81
      %p253 = pneg %p78
      %p254 = pneg %p102
      %p255 = pneg %p99
      %p256 = pneg %p123
      %p257 = pneg %p120
      %p258 = pneg %p144
      %p259 = pneg %p141
      %p260 = pneg %p165
      %p261 = pneg %p162
      %p262 = pneg %p191
      %p263 = pneg %p188
      %p264 = scmp.lt.s32.totalorder %s18, 1
      %s265 = scalar_select %p264, %s18, 1
      %s266 = smul.addr %s265, 2
      %s267 = smul.addr %s266, 8
      %s268 = scalar_lea.vmem %s7, %s267
      %p269 = scmp.lt.s32.totalorder %s18, 1
      %s270 = scalar_select %p269, %s18, 1
      %s271 = smul.addr %s270, 2
      %s272 = smul.addr %s271, 4
      %s273 = scalar_lea.vmem %s0, %s272
      %p274 = scmp.lt.s32.totalorder %s18, 1
      %s275 = scalar_select %p274, %s18, 1
      %s276 = smul.addr %s275, 2
      %s277 = smul.addr %s276, 8
      %s278 = scalar_lea.vmem %s7, %s277
      %v279 = vld [vmem:[%s273] sm:$0xff]
      %v280 = vld [vmem:[%s1] sm:$0xf]
      %282 = vset.pattern.permute.xlu0 0
      %283 = vperm.xlu0 %282, %v280
      %v284 = vpop.permute.xlu0 %283
      %v286 = vunpack.c.l.s4 839922192
      %v287 = vunpack.c.0.s8 %v286
      %v288 = vlaneseq
      %v289 = vshrl.u32 %v288, 7
      %v290 = vsub.s32 %v287, %v289
      %v291 = vrot.slane %v284, %v290
      %v293 = vmul.f32 %v279, %v291
      %v294 = vld [vmem:[%s2] sm:$0xf]
      %296 = vset.pattern.permute.xlu0 0
      %297 = vperm.xlu0 %296, %v294
      %v298 = vpop.permute.xlu0 %297
      %v300 = vunpack.c.l.s4 839922192
      %v301 = vunpack.c.0.s8 %v300
      %v302 = vlaneseq
      %v303 = vshrl.u32 %v302, 7
      %v304 = vsub.s32 %v301, %v303
      %v305 = vrot.slane %v298, %v304
      %v307 = vadd.f32 %v293, %v305
      %v308 = vmax.f32 %v307, 0.0
      %v309 = vld [vmem:[%s3] sm:$0xff]
      %v310 = vld [vmem:[%s3 + $0x8] sm:$0xff]
      %v311 = vld [vmem:[%s3 + $0x10] sm:$0xff]
      %v312 = vld [vmem:[%s3 + $0x18] sm:$0xff]
      %v313 = vld [vmem:[%s4] sm:$0xff]
      %v314 = vld [vmem:[%s4 + $0x8] sm:$0xff]
      %v315 = vld [vmem:[%s4 + $0x10] sm:$0xff]
      %v316 = vld [vmem:[%s4 + $0x18] sm:$0xff]
      %318 = vset.pattern.permute.xlu0 0
      %319 = vperm.xlu0 %318, %v313
      %v320 = vpop.permute.xlu0 %319
      %323 = vset.pattern.permute.xlu0 0
      %324 = vperm.xlu0 %323, %v314
      %v325 = vpop.permute.xlu0 %324
      %328 = vset.pattern.permute.xlu0 0
      %329 = vperm.xlu0 %328, %v315
      %v330 = vpop.permute.xlu0 %329
      %333 = vset.pattern.permute.xlu0 0
      %334 = vperm.xlu0 %333, %v316
      %v335 = vpop.permute.xlu0 %334
      %v338 = vcombine.high %v308, %v308
      %vm339 = vcmask 31744
      %v341 = vsel %vm339, %v309, 0
      %v344 = vsel %vm339, %v310, 0
      %v347 = vsel %vm339, %v311, 0
      %v350 = vsel %vm339, %v312, 0
      %vm352 = vcmask 1043456
      %v353 = vsel %vm352, %v308, 0
      %v355 = vsel %vm352, %v338, 0
      %357 = vmatprep.subr.mxu0 %v355
      %358 = vmatpush1.msra.mxu0 %v353
      %359 = vmatprep.subr.mxu0 0.0
      %360 = vmatpush1.msra.mxu0 0.0
      %361 = vmatprep.subr.mxu0 0.0
      %362 = vmatpush1.msra.mxu0 0.0
      %363 = vmatprep.subr.mxu0 0.0
      %364 = vmatpush1.msra.mxu0 0.0
      %365 = vmatprep.subr.mxu0 0.0
      %366 = vmatpush1.msra.mxu0 0.0
      %367 = vmatprep.subr.mxu0 0.0
      %368 = vmatpush1.msra.mxu0 0.0
      %369 = vmatprep.subr.mxu0 0.0
      %370 = vmatpush1.msra.mxu0 0.0
      %371 = vmatprep.subr.mxu0 0.0
      %372 = vmatpush1.msra.mxu0 0.0
      %373 = vmatprep.subr.mxu0 0.0
      %374 = vmatpush1.msra.mxu0 0.0
      %375 = vmatprep.subr.mxu0 0.0
      %376 = vmatpush1.msra.mxu0 0.0
      %377 = vmatprep.subr.mxu0 0.0
      %378 = vmatpush1.msra.mxu0 0.0
      %379 = vmatprep.subr.mxu0 0.0
      %380 = vmatpush1.msra.mxu0 0.0
      %381 = vmatprep.subr.mxu0 0.0
      %382 = vmatpush1.msra.mxu0 0.0
      %383 = vmatprep.subr.mxu0 0.0
      %384 = vmatpush1.msra.mxu0 0.0
      %385 = vmatprep.subr.mxu0 0.0
      %386 = vmatpush1.msra.mxu0 0.0
      %387 = vmatprep.subr.mxu0 0.0
      %388 = vmatpush1.msra.mxu0 0.0
      %389 = vmatprep.subr.mxu0 0.0
      %390 = vmatpush1.msra.mxu0 0.0
      %391 = vmatprep.subr.mxu0 0.0
      %392 = vmatpush1.msra.mxu0 0.0
      %393 = vmatprep.subr.mxu0 0.0
      %394 = vmatpush1.msra.mxu0 0.0
      %395 = vmatprep.subr.mxu0 0.0
      %396 = vmatpush1.msra.mxu0 0.0
      %397 = vmatprep.subr.mxu0 0.0
      %398 = vmatpush1.msra.mxu0 0.0
      %399 = vmatprep.subr.mxu0 0.0
      %400 = vmatpush1.msra.mxu0 0.0
      %401 = vmatprep.subr.mxu0 0.0
      %402 = vmatpush1.msra.mxu0 0.0
      %403 = vmatprep.subr.mxu0 0.0
      %404 = vmatpush1.msra.mxu0 0.0
      %405 = vmatprep.subr.mxu0 0.0
      %406 = vmatpush1.msra.mxu0 0.0
      %407 = vmatprep.subr.mxu0 0.0
      %408 = vmatpush1.msra.mxu0 0.0
      %409 = vmatprep.subr.mxu0 0.0
      %410 = vmatpush1.msra.mxu0 0.0
      %411 = vmatprep.subr.mxu0 0.0
      %412 = vmatpush1.msra.mxu0 0.0
      %413 = vmatprep.subr.mxu0 0.0
      %414 = vmatpush1.msra.mxu0 0.0
      %415 = vmatprep.subr.mxu0 0.0
      %416 = vmatpush1.msra.mxu0 0.0
      %417 = vmatprep.subr.mxu0 0.0
      %418 = vmatpush1.msra.mxu0 0.0
      %419 = vmatprep.subr.mxu0 0.0
      %420 = vmatpush1.msra.mxu0 0.0
      %421 = vmatprep.mubr.f32.mxu0 0.0
      %422 = vmatmul.mubr.f32.gmra.mrb[0].mxu0 %v341
      %v423 = vpop.f32.mrb[0].mxu0
      %v424 = vadd.f32 %v320, %v423
      %v425 = vpop.f32.mrb[0].mxu0
      %v426 = vadd.f32 %v320, %v425
      %427 = vmatprep.mubr.f32.mxu0 0.0
      %428 = vmatmul.mubr.f32.gmra.mrb[0].mxu0 %v344
      %v429 = vpop.f32.mrb[0].mxu0
      %v430 = vadd.f32 %v325, %v429
      %v431 = vpop.f32.mrb[0].mxu0
      %v432 = vadd.f32 %v325, %v431
      %433 = vmatprep.mubr.f32.mxu0 0.0
      %434 = vmatmul.mubr.f32.gmra.mrb[0].mxu0 %v347
      %v435 = vpop.f32.mrb[0].mxu0
      %v436 = vadd.f32 %v330, %v435
      %v437 = vpop.f32.mrb[0].mxu0
      %v438 = vadd.f32 %v330, %v437
      %439 = vmatprep.mubr.f32.mxu0 0.0
      %440 = vmatmul.mubr.f32.gmra.mrb[0].mxu0 %v350
      %v441 = vpop.f32.mrb[0].mxu0
      %v442 = vadd.f32 %v335, %v441
      %v443 = vpop.f32.mrb[0].mxu0
      %v444 = vadd.f32 %v335, %v443
      %445 = vdwg.mxu0
      %v446 = vmax.f32 %v424, 0.0
      %v447 = vmax.f32 %v426, 0.0
      %v448 = vmax.f32 %v430, 0.0
      %v449 = vmax.f32 %v432, 0.0
      %v450 = vmax.f32 %v436, 0.0
      %v451 = vmax.f32 %v438, 0.0
      %v452 = vmax.f32 %v442, 0.0
      %v453 = vmax.f32 %v444, 0.0
      %v454 = vld [vmem:[%s5] sm:$0xff]
      %v455 = vld [vmem:[%s5 + $0x8] sm:$0xff]
      %v456 = vld [vmem:[%s5 + $0x10] sm:$0xff]
      %v457 = vld [vmem:[%s5 + $0x18] sm:$0xff]
      %v458 = vld [vmem:[%s5 + $0x20] sm:$0xff]
      %v459 = vld [vmem:[%s5 + $0x28] sm:$0xff]
      %v460 = vld [vmem:[%s5 + $0x30] sm:$0xff]
      %v461 = vld [vmem:[%s5 + $0x38] sm:$0xff]
      %v462 = vld [vmem:[%s5 + $0x40] sm:$0xff]
      %vm463 = vcmask 261120
      %v465 = vsel %vm463, %v454, 0
      %v468 = vsel %vm463, %v455, 0
      %v471 = vsel %vm463, %v456, 0
      %v474 = vsel %vm463, %v457, 0
      %v477 = vsel %vm463, %v458, 0
      %v480 = vsel %vm463, %v459, 0
      %v483 = vsel %vm463, %v460, 0
      %v486 = vsel %vm463, %v461, 0
      %v489 = vsel %vm463, %v462, 0
      %491 = vmatprep.subr.mxu0 %v447
      %492 = vmatpush1.msra.mxu0 %v446
      %493 = vmatprep.subr.mxu0 %v449
      %494 = vmatpush1.msra.mxu0 %v448
      %495 = vmatprep.subr.mxu0 %v451
      %496 = vmatpush1.msra.mxu0 %v450
      %497 = vmatprep.subr.mxu0 %v453
      %498 = vmatpush1.msra.mxu0 %v452
      %499 = vmatprep.subr.mxu0 0.0
      %500 = vmatpush1.msra.mxu0 0.0
      %501 = vmatprep.subr.mxu0 0.0
      %502 = vmatpush1.msra.mxu0 0.0
      %503 = vmatprep.subr.mxu0 0.0
      %504 = vmatpush1.msra.mxu0 0.0
      %505 = vmatprep.subr.mxu0 0.0
      %506 = vmatpush1.msra.mxu0 0.0
      %507 = vmatprep.subr.mxu0 0.0
      %508 = vmatpush1.msra.mxu0 0.0
      %509 = vmatprep.subr.mxu0 0.0
      %510 = vmatpush1.msra.mxu0 0.0
      %511 = vmatprep.subr.mxu0 0.0
      %512 = vmatpush1.msra.mxu0 0.0
      %513 = vmatprep.subr.mxu0 0.0
      %514 = vmatpush1.msra.mxu0 0.0
      %515 = vmatprep.subr.mxu0 0.0
      %516 = vmatpush1.msra.mxu0 0.0
      %517 = vmatprep.subr.mxu0 0.0
      %518 = vmatpush1.msra.mxu0 0.0
      %519 = vmatprep.subr.mxu0 0.0
      %520 = vmatpush1.msra.mxu0 0.0
      %521 = vmatprep.subr.mxu0 0.0
      %522 = vmatpush1.msra.mxu0 0.0
      %523 = vmatprep.subr.mxu0 0.0
      %524 = vmatpush1.msra.mxu0 0.0
      %525 = vmatprep.subr.mxu0 0.0
      %526 = vmatpush1.msra.mxu0 0.0
      %527 = vmatprep.subr.mxu0 0.0
      %528 = vmatpush1.msra.mxu0 0.0
      %529 = vmatprep.subr.mxu0 0.0
      %530 = vmatpush1.msra.mxu0 0.0
      %531 = vmatprep.subr.mxu0 0.0
      %532 = vmatpush1.msra.mxu0 0.0
      %533 = vmatprep.subr.mxu0 0.0
      %534 = vmatpush1.msra.mxu0 0.0
      %535 = vmatprep.subr.mxu0 0.0
      %536 = vmatpush1.msra.mxu0 0.0
      %537 = vmatprep.subr.mxu0 0.0
      %538 = vmatpush1.msra.mxu0 0.0
      %539 = vmatprep.subr.mxu0 0.0
      %540 = vmatpush1.msra.mxu0 0.0
      %541 = vmatprep.subr.mxu0 0.0
      %542 = vmatpush1.msra.mxu0 0.0
      %543 = vmatprep.subr.mxu0 0.0
      %544 = vmatpush1.msra.mxu0 0.0
      %545 = vmatprep.subr.mxu0 0.0
      %546 = vmatpush1.msra.mxu0 0.0
      %547 = vmatprep.subr.mxu0 0.0
      %548 = vmatpush1.msra.mxu0 0.0
      %549 = vmatprep.subr.mxu0 0.0
      %550 = vmatpush1.msra.mxu0 0.0
      %551 = vmatprep.subr.mxu0 0.0
      %552 = vmatpush1.msra.mxu0 0.0
      %553 = vmatprep.subr.mxu0 0.0
      %554 = vmatpush1.msra.mxu0 0.0
      %555 = vmatprep.mubr.f32.mxu0 0.0
      %556 = vmatmul.mubr.f32.gmra.mrb[0].mxu0 %v465
      %v557 = vpop.f32.mrb[0].mxu0
      %v558 = vadd.f32 0.0, %v557
      %v559 = vpop.f32.mrb[0].mxu0
      %v560 = vadd.f32 0.0, %v559
      %561 = vmatprep.mubr.f32.mxu0 0.0
      %562 = vmatmul.mubr.f32.gmra.mrb[0].mxu0 %v468
      %v563 = vpop.f32.mrb[0].mxu0
      %v564 = vadd.f32 0.0, %v563
      %v565 = vpop.f32.mrb[0].mxu0
      %v566 = vadd.f32 0.0, %v565
      %567 = vmatprep.mubr.f32.mxu0 0.0
      %568 = vmatmul.mubr.f32.gmra.mrb[0].mxu0 %v471
      %v569 = vpop.f32.mrb[0].mxu0
      %v570 = vadd.f32 0.0, %v569
      %v571 = vpop.f32.mrb[0].mxu0
      %v572 = vadd.f32 0.0, %v571
      %573 = vmatprep.mubr.f32.mxu0 0.0
      %574 = vmatmul.mubr.f32.gmra.mrb[0].mxu0 %v474
      %v575 = vpop.f32.mrb[0].mxu0
      %v576 = vadd.f32 0.0, %v575
      %v577 = vpop.f32.mrb[0].mxu0
      %v578 = vadd.f32 0.0, %v577
      %579 = vmatprep.mubr.f32.mxu0 0.0
      %580 = vmatmul.mubr.f32.gmra.mrb[0].mxu0 %v477
      %v581 = vpop.f32.mrb[0].mxu0
      %v582 = vadd.f32 0.0, %v581
      %v583 = vpop.f32.mrb[0].mxu0
      %v584 = vadd.f32 0.0, %v583
      %585 = vmatprep.mubr.f32.mxu0 0.0
      %586 = vmatmul.mubr.f32.gmra.mrb[0].mxu0 %v480
      %v587 = vpop.f32.mrb[0].mxu0
      %v588 = vadd.f32 0.0, %v587
      %v589 = vpop.f32.mrb[0].mxu0
      %v590 = vadd.f32 0.0, %v589
      %591 = vmatprep.mubr.f32.mxu0 0.0
      %592 = vmatmul.mubr.f32.gmra.mrb[0].mxu0 %v483
      %v593 = vpop.f32.mrb[0].mxu0
      %v594 = vadd.f32 0.0, %v593
      %v595 = vpop.f32.mrb[0].mxu0
      %v596 = vadd.f32 0.0, %v595
      %597 = vmatprep.mubr.f32.mxu0 0.0
      %598 = vmatmul.mubr.f32.gmra.mrb[0].mxu0 %v486
      %v599 = vpop.f32.mrb[0].mxu0
      %v600 = vadd.f32 0.0, %v599
      %v601 = vpop.f32.mrb[0].mxu0
      %v602 = vadd.f32 0.0, %v601
      %603 = vmatprep.mubr.f32.mxu0 0.0
      %604 = vmatmul.mubr.f32.gmra.mrb[0].mxu0 %v489
      %v605 = vpop.f32.mrb[0].mxu0
      %v606 = vadd.f32 0.0, %v605
      %v607 = vpop.f32.mrb[0].mxu0
      %v608 = vadd.f32 0.0, %v607
      %609 = vdwg.mxu0
      %610 = vst [vmem:[#allocation2] sm:$0xff] %v582
      %611 = vst [vmem:[#allocation2 + $0x8] sm:$0xff] %v584
      %v612 = vld [vmem:[%s6] ss:$2 sm:$0x3]
      %v614 = vlaneseq
      %v615 = vshrl.u32 %v614, 7
      %v616 = vsub.s32 0, %v615
      %v617 = vrot.slane %v612, %v616
      %v618 = vlaneseq
      %v619 = vshrl.u32 %v618, 7
      %v620 = vsub.s32 1, %v619
      %v621 = vrot.slane %v612, %v620
      %622 = vrot.lane.b32.xlu0 %v617, 111
      %v623 = vpop.permute.xlu0 %622
      %624 = vrot.lane.b32.xlu0 %v621, 111
      %v625 = vpop.permute.xlu0 %624
      %vm626 = vcmask 908288
      %v627 = vsel %vm626, %v623, %v625
      %v630 = vmul.f32 %v558, %v627
      %v631 = vmul.f32 %v560, %v625
      %v632 = vld [vmem:[#allocation2] sm:$0xff]
      %v633 = vld [vmem:[#allocation2 + $0x8] sm:$0xff]
      %636 = vrot.lane.b32.xlu0 %v630, 17
      %v637 = vpop.permute.xlu0 %636
      %638 = vrot.lane.b32.xlu0 %v631, 17
      %v639 = vpop.permute.xlu0 %638
      %vm640 = vcmask 138240
      %v641 = vsel %vm640, %v637, %v639
      %v644 = vadd.f32 %v632, %v637
      %v645 = vadd.f32 %v633, %v641
      %vm646 = vcmask 1047688
      %647 = vst.msk [vmem:[#allocation2] sm:$0xff] %vm646, %v644
      %648 = vst [vmem:[#allocation2 + $0x8] sm:$0xff] %v645
      %v649 = vld [vmem:[#allocation2] sm:$0xff]
      %v650 = vld [vmem:[#allocation2 + $0x8] sm:$0xff]
      %653 = vrot.lane.b32.xlu0 %v564, 16
      %v654 = vpop.permute.xlu0 %653
      %655 = vrot.lane.b32.xlu0 %v566, 16
      %v656 = vpop.permute.xlu0 %655
      %vm657 = vcmask 130048
      %v658 = vsel %vm657, %v654, %v656
      %v661 = vadd.f32 %v649, %v654
      %v662 = vadd.f32 %v650, %v658
      %vm663 = vcmask 1047680
      %664 = vst.msk [vmem:[#allocation2] sm:$0xff] %vm663, %v661
      %665 = vst [vmem:[#allocation2 + $0x8] sm:$0xff] %v662
      %s666 = scalar_lea.vmem %s6, 1
      %v667 = vld [vmem:[%s666] ss:$2 sm:$0x3]
      %v669 = vlaneseq
      %v670 = vshrl.u32 %v669, 7
      %v671 = vsub.s32 0, %v670
      %v672 = vrot.slane %v667, %v671
      %v673 = vlaneseq
      %v674 = vshrl.u32 %v673, 7
      %v675 = vsub.s32 1, %v674
      %v676 = vrot.slane %v667, %v675
      %677 = vrot.lane.b32.xlu0 %v672, 113
      %v678 = vpop.permute.xlu0 %677
      %679 = vrot.lane.b32.xlu0 %v676, 113
      %v680 = vpop.permute.xlu0 %679
      %vm681 = vcmask 924672
      %v682 = vsel %vm681, %v678, %v680
      %v685 = vmul.f32 %v570, %v682
      %v686 = vmul.f32 %v572, %v680
      %v687 = vld [vmem:[#allocation2] sm:$0xff]
      %v688 = vld [vmem:[#allocation2 + $0x8] sm:$0xff]
      %691 = vrot.lane.b32.xlu0 %v685, 15
      %v692 = vpop.permute.xlu0 %691
      %693 = vrot.lane.b32.xlu0 %v686, 15
      %v694 = vpop.permute.xlu0 %693
      %vm695 = vcmask 121856
      %v696 = vsel %vm695, %v692, %v694
      %v699 = vadd.f32 %v687, %v692
      %v700 = vadd.f32 %v688, %v696
      %vm701 = vcmask 1047672
      %702 = vst.msk [vmem:[#allocation2] sm:$0xff] %vm701, %v699
      %703 = vst [vmem:[#allocation2 + $0x8] sm:$0xff] %v700
      %v704 = vld [vmem:[%s6] ss:$2 sm:$0x3]
      %v706 = vlaneseq
      %v707 = vshrl.u32 %v706, 7
      %v708 = vsub.s32 0, %v707
      %v709 = vrot.slane %v704, %v708
      %v710 = vlaneseq
      %v711 = vshrl.u32 %v710, 7
      %v712 = vsub.s32 1, %v711
      %v713 = vrot.slane %v704, %v712
      %714 = vrot.lane.b32.xlu0 %v709, 127
      %v715 = vpop.permute.xlu0 %714
      %716 = vrot.lane.b32.xlu0 %v713, 127
      %v717 = vpop.permute.xlu0 %716
      %vm718 = vcmask 1039360
      %v719 = vsel %vm718, %v715, %v717
      %v722 = vmul.f32 %v576, %v719
      %v723 = vmul.f32 %v578, %v717
      %v724 = vld [vmem:[#allocation2] sm:$0xff]
      %v725 = vld [vmem:[#allocation2 + $0x8] sm:$0xff]
      %728 = vrot.lane.b32.xlu0 %v722, 1
      %v729 = vpop.permute.xlu0 %728
      %730 = vrot.lane.b32.xlu0 %v723, 1
      %v731 = vpop.permute.xlu0 %730
      %vm732 = vcmask 7168
      %v733 = vsel %vm732, %v729, %v731
      %v736 = vadd.f32 %v724, %v729
      %v737 = vadd.f32 %v725, %v733
      %vm738 = vcmask 1047560
      %739 = vst.msk [vmem:[#allocation2] sm:$0xff] %vm738, %v736
      %740 = vst [vmem:[#allocation2 + $0x8] sm:$0xff] %v737
      %v741 = vld [vmem:[%s666] ss:$2 sm:$0x3]
      %v743 = vlaneseq
      %v744 = vshrl.u32 %v743, 7
      %v745 = vsub.s32 0, %v744
      %v746 = vrot.slane %v741, %v745
      %v747 = vlaneseq
      %v748 = vshrl.u32 %v747, 7
      %v749 = vsub.s32 1, %v748
      %v750 = vrot.slane %v741, %v749
      %751 = vrot.lane.b32.xlu0 %v746, 1
      %v752 = vpop.permute.xlu0 %751
      %753 = vrot.lane.b32.xlu0 %v750, 1
      %v754 = vpop.permute.xlu0 %753
      %v755 = vsel %vm732, %v752, %v754
      %v758 = vmul.f32 %v588, %v752
      %v759 = vmul.f32 %v590, %v755
      %v760 = vld [vmem:[#allocation2] sm:$0xff]
      %v761 = vld [vmem:[#allocation2 + $0x8] sm:$0xff]
      %764 = vrot.lane.b32.xlu0 %v758, 127
      %v765 = vpop.permute.xlu0 %764
      %766 = vrot.lane.b32.xlu0 %v759, 127
      %v767 = vpop.permute.xlu0 %766
      %v768 = vsel %vm718, %v765, %v767
      %v771 = vadd.f32 %v760, %v768
      %v772 = vadd.f32 %v761, %v767
      %773 = vst [vmem:[#allocation2] sm:$0xff] %v771
      %774 = vst.msk [vmem:[#allocation2 + $0x8] sm:$0xff] %vm718, %v772
      %v775 = vld [vmem:[%s6] ss:$2 sm:$0x3]
      %v777 = vlaneseq
      %v778 = vshrl.u32 %v777, 7
      %v779 = vsub.s32 0, %v778
      %v780 = vrot.slane %v775, %v779
      %v781 = vlaneseq
      %v782 = vshrl.u32 %v781, 7
      %v783 = vsub.s32 1, %v782
      %v784 = vrot.slane %v775, %v783
      %785 = vrot.lane.b32.xlu0 %v780, 15
      %v786 = vpop.permute.xlu0 %785
      %787 = vrot.lane.b32.xlu0 %v784, 15
      %v788 = vpop.permute.xlu0 %787
      %v789 = vsel %vm695, %v786, %v788
      %v792 = vmul.f32 %v594, %v786
      %v793 = vmul.f32 %v596, %v789
      %v794 = vld [vmem:[#allocation2] sm:$0xff]
      %v795 = vld [vmem:[#allocation2 + $0x8] sm:$0xff]
      %798 = vrot.lane.b32.xlu0 %v792, 113
      %v799 = vpop.permute.xlu0 %798
      %800 = vrot.lane.b32.xlu0 %v793, 113
      %v801 = vpop.permute.xlu0 %800
      %v802 = vsel %vm681, %v799, %v801
      %v805 = vadd.f32 %v794, %v802
      %v806 = vadd.f32 %v795, %v801
      %807 = vst [vmem:[#allocation2] sm:$0xff] %v805
      %808 = vst.msk [vmem:[#allocation2 + $0x8] sm:$0xff] %vm681, %v806
      %v809 = vld [vmem:[#allocation2] sm:$0xff]
      %v810 = vld [vmem:[#allocation2 + $0x8] sm:$0xff]
      %813 = vrot.lane.b32.xlu0 %v600, 112
      %v814 = vpop.permute.xlu0 %813
      %815 = vrot.lane.b32.xlu0 %v602, 112
      %v816 = vpop.permute.xlu0 %815
      %vm817 = vcmask 916480
      %v818 = vsel %vm817, %v814, %v816
      %v821 = vadd.f32 %v809, %v818
      %v822 = vadd.f32 %v810, %v816
      %823 = vst [vmem:[#allocation2] sm:$0xff] %v821
      %824 = vst.msk [vmem:[#allocation2 + $0x8] sm:$0xff] %vm817, %v822
      %v825 = vld [vmem:[%s666] ss:$2 sm:$0x3]
      %v827 = vlaneseq
      %v828 = vshrl.u32 %v827, 7
      %v829 = vsub.s32 0, %v828
      %v830 = vrot.slane %v825, %v829
      %v831 = vlaneseq
      %v832 = vshrl.u32 %v831, 7
      %v833 = vsub.s32 1, %v832
      %v834 = vrot.slane %v825, %v833
      %835 = vrot.lane.b32.xlu0 %v830, 17
      %v836 = vpop.permute.xlu0 %835
      %837 = vrot.lane.b32.xlu0 %v834, 17
      %v838 = vpop.permute.xlu0 %837
      %v839 = vsel %vm640, %v836, %v838
      %v842 = vmul.f32 %v606, %v836
      %v843 = vmul.f32 %v608, %v839
      %v844 = vld [vmem:[#allocation2] sm:$0xff]
      %v845 = vld [vmem:[#allocation2 + $0x8] sm:$0xff]
      %848 = vrot.lane.b32.xlu0 %v842, 111
      %v849 = vpop.permute.xlu0 %848
      %850 = vrot.lane.b32.xlu0 %v843, 111
      %v851 = vpop.permute.xlu0 %850
      %v852 = vsel %vm626, %v849, %v851
      %v855 = vadd.f32 %v844, %v852
      %v856 = vadd.f32 %v845, %v851
      %857 = vst [vmem:[#allocation2] sm:$0xff] %v855
      %858 = vst.msk [vmem:[#allocation2 + $0x8] sm:$0xff] %vm626, %v856
      %v859 = vld [vmem:[#allocation2] sm:$0xff]
      %v860 = vld [vmem:[#allocation2 + $0x8] sm:$0xff]
      %861 = vst [vmem:[%s278] sm:$0xff] %v859
      %862 = vst [vmem:[%s278 + $0x8] sm:$0xff] %v860
      %p863 = scmp.lt.s32.totalorder %s18, 1
      %s864 = scalar_select %p863, %s18, 1
      %s865 = smul.addr %s864, 2
      %s866 = smul.addr %s865, 8
      %s867 = scalar_lea.vmem %s7, %s866
      // Predicated region
      $region49: #{dense_layer_forward.1} parent=47 // pred_check
        %p868 = pneg %p188
      $region50: #{dense_layer_forward.1} parent=47 // pred_check_branch
        %870 = sbr.rel (%p868) target = $region52
      $region51: #{dense_layer_forward.1} parent=47 // pred_region
        _
      $region52: #{dense_layer_forward.1} parent=47 // pred_fallthru
        _
    $region48: #{dense_layer_forward.1} parent=5 // pred_fallthru
      _
    %p871 = scmp.le.s32.totalorder 2, %s13
    // Predicated region
    $region53: #{dense_layer_forward.1} parent=5 // pred_check
      %p872 = pneg %p871
    $region54: #{dense_layer_forward.1} parent=5 // pred_check_branch
      %874 = sbr.rel (%p872) target = $region56
    $region55: #{dense_layer_forward.1} parent=5 // pred_region
      %s875 = ssub.s32 %s13, 2
      // Predicated region
      $region57: #{dense_layer_forward.1} parent=55 // pred_check
        %p876 = pneg %p194
      $region58: #{dense_layer_forward.1} parent=55 // pred_check_branch
        %878 = sbr.rel (%p876) target = $region60
      $region59: #{dense_layer_forward.1} parent=55 // pred_region
        %p879 = scmp.lt.s32.totalorder %s19, 1
        %s880 = scalar_select %p879, %s19, 1
        %s881 = smul.addr %s880, 2
        %s882 = smul.addr %s881, 8
        %s883 = scalar_lea.vmem %s7, %s882
      $region60: #{dense_layer_forward.1} parent=55 // pred_fallthru
        _
    $region56: #{dense_layer_forward.1} parent=5 // pred_fallthru
      _
  $region6: #{dense_layer_forward.1} parent=0 // loop_footer
    %s17 = sadd.s32 1, %s13
  $region7: #{dense_layer_forward.1} parent=0 // loop_footer_branch
    %12 = sbr.rel target = $region3
  $region8: #{dense_layer_forward.1} parent=0 // loop_exit
    _

</llo_original>
